<compile_context>
chip_gen: v6e
topology: v6e:2x2x1
jax: 0.10.0
libtpu: 0.0.40
codegen_flags: <defaults>
</compile_context>

<pallas_src>
from functools import partial

import jax
import jax.numpy as jnp
from jax.experimental import pallas as pl
from jax.experimental.pallas import tpu as pltpu  # noqa: F401  (TPU backend)


OUT_LANES = 128  # lane-dense output slab width


# ----------------------------- fused Pallas kernel ---------------------------

def _fused_gnn_kernel(*refs, n_graph, n_hidden, ax_first):
    """Refs order:
        a, x,
        (w, b) * n_graph,
        pool,                       # row-normalized (1/count) one-hot, (G, N)
        (w, b) * n_hidden,
        w_out_pad, b_out_pad,       # padded to OUT_LANES lanes
        o                           # output (G, OUT_LANES) f32
    """
    it = iter(refs)
    a_ref = next(it)
    x_ref = next(it)

    a = a_ref[...]            # bf16 adjacency, loaded once, reused by all layers
    h = x_ref[...]            # bf16 node features

    # --- GCN layers: relu(A_hat @ X @ W + b), association chosen per layer ---
    for li in range(n_graph):
        w_ref = next(it)
        b_ref = next(it)
        w = w_ref[...]
        b = b_ref[...]
        if ax_first[li]:
            # Fin < Fout: (A @ H) @ W  -> N^2 * Fin MXU work on the big term
            ah = jnp.dot(a, h.astype(a.dtype), preferred_element_type=jnp.float32)
            y = jnp.dot(ah.astype(w.dtype), w, preferred_element_type=jnp.float32)
        else:
            # Fout <= Fin: A @ (H @ W) -> N^2 * Fout MXU work on the big term
            hw = jnp.dot(h.astype(w.dtype), w, preferred_element_type=jnp.float32)
            y = jnp.dot(a, hw.astype(a.dtype), preferred_element_type=jnp.float32)
        h = jnp.maximum(y + b, 0.0)   # f32

    # --- global mean pool: pool is one-hot / count, so a single matmul ---
    pool_ref = next(it)
    z = jnp.dot(pool_ref[...], h, preferred_element_type=jnp.float32)   # (G, F)

    # --- classifier: [Linear -> ReLU -> Dropout(identity)] * k ---
    for _ in range(n_hidden):
        w_ref = next(it)
        b_ref = next(it)
        z = jnp.maximum(
            jnp.dot(z, w_ref[...], preferred_element_type=jnp.float32) + b_ref[...],
            0.0,
        )

    # --- final Linear, lane-padded to OUT_LANES for unmasked stores ---
    wo_ref = next(it)
    bo_ref = next(it)
    o_ref = next(it)
    o_ref[...] = jnp.dot(z, wo_ref[...], preferred_element_type=jnp.float32) + bo_ref[...]


# ----------------------------- wrapper ---------------------------------------

def _full_spec(shape):
    return pl.BlockSpec(shape, lambda: tuple(0 for _ in shape))


def build_normalized_adjacency(edge_index, num_nodes):
    """Dense GCN-normalized adjacency with self-loops: D^-1/2 (A + I) D^-1/2."""
    src, dst = edge_index[0], edge_index[1]
    a = jnp.zeros((num_nodes, num_nodes), jnp.float32)
    a = a.at[dst, src].add(1.0)                    # message flows src -> dst
    a = a + jnp.eye(num_nodes, dtype=jnp.float32)  # add self loops
    deg = jnp.sum(a, axis=1)
    dinv = jax.lax.rsqrt(jnp.maximum(deg, 1e-12))
    return dinv[:, None] * a * dinv[None, :]


def gnn_forward(params, x, edge_index, batch, num_graphs):
    n = x.shape[0]

    # Adjacency path in bf16 (MXU-native, halves the O(N^2) bytes), f32 accumulate.
    a_hat = build_normalized_adjacency(edge_index, n).astype(jnp.bfloat16)
    x_bf = x.astype(jnp.bfloat16)

    # Fold mean-pool 1/count into the pooling matrix (no in-kernel reduce/divide).
    onehot = (batch[None, :] == jnp.arange(num_graphs)[:, None]).astype(jnp.float32)
    counts = jnp.sum(onehot, axis=1, keepdims=True)
    pool_w = onehot / jnp.maximum(counts, 1.0)

    graph_layers = [(w.astype(jnp.bfloat16), b) for (w, b) in params["graph_layers"]]
    hidden_layers = params["classifier_hidden"]
    w_out, b_out = params["classifier_out"]
    fout = w_out.shape[1]

    # Lane-dense final output: pad the output projection to OUT_LANES lanes.
    w_out_p = jnp.zeros((w_out.shape[0], OUT_LANES), jnp.float32).at[:, :fout].set(w_out)
    b_out_p = jnp.zeros((1, OUT_LANES), jnp.float32).at[:, :fout].set(b_out)

    # Per-layer matmul association (A@X first iff Fin < Fout).
    ax_first = tuple(bool(w.shape[0] < w.shape[1]) for (w, _) in params["graph_layers"])

    inputs = [a_hat, x_bf]
    for (w, b) in graph_layers:
        inputs += [w, b]
    inputs.append(pool_w)
    for (w, b) in hidden_layers:
        inputs += [w, b]
    inputs += [w_out_p, b_out_p]

    kernel = partial(
        _fused_gnn_kernel,
        n_graph=len(graph_layers),
        n_hidden=len(hidden_layers),
        ax_first=ax_first,
    )

    out = pl.pallas_call(
        kernel,
        out_shape=jax.ShapeDtypeStruct((num_graphs, OUT_LANES), jnp.float32),
        in_specs=[_full_spec(arr.shape) for arr in inputs],
        out_specs=_full_spec((num_graphs, OUT_LANES)),
    )(*inputs)

    return out[:, :fout]


# ----------------------------- parameter init --------------------------------

def init_params(key, graph_layer_sizes, hidden_layer_sizes):
    params = {"graph_layers": [], "classifier_hidden": []}
    for (fin, fo) in graph_layer_sizes:
        key, kw = jax.random.split(key)
        w = jax.random.normal(kw, (fin, fo), jnp.float32) * (1.0 / jnp.sqrt(fin))
        b = jnp.zeros((1, fo), jnp.float32)
        params["graph_layers"].append((w, b))
    for (fin, fo) in hidden_layer_sizes:
        key, kw, kb = jax.random.split(key, 3)
        w = jax.random.normal(kw, (fin, fo), jnp.float32) * (1.0 / jnp.sqrt(fin))
        b = jax.random.normal(kb, (1, fo), jnp.float32) * 0.01
        params["classifier_hidden"].append((w, b))
    fin = hidden_layer_sizes[-1][1]
    key, kw, kb = jax.random.split(key, 3)
    w = jax.random.normal(kw, (fin, 1), jnp.float32) * (1.0 / jnp.sqrt(fin))
    b = jax.random.normal(kb, (1, 1), jnp.float32) * 0.01
    params["classifier_out"] = (w, b)
    return params


# ----------------------------- main ------------------------------------------

if __name__ == "__main__":
    key = jax.random.PRNGKey(0)

    # module config
    graph_layer_sizes = [(8, 32), (32, 32)]
    hidden_layer_sizes = [(32, 16)]
    num_nodes = 16
    num_edges = 24
    num_graphs = 2
    feat_in = graph_layer_sizes[0][0]

    key, kx, ke, kp = jax.random.split(key, 4)
    x = jax.random.normal(kx, (num_nodes, feat_in), jnp.float32)
    # random directed edges (GCNConv semantics with dense normalized adjacency)
    edge_index = jax.random.randint(ke, (2, num_edges), 0, num_nodes, jnp.int32)
    # first half of nodes -> graph 0, second half -> graph 1
    batch = jnp.concatenate([
        jnp.zeros((num_nodes // 2,), jnp.int32),
        jnp.ones((num_nodes - num_nodes // 2,), jnp.int32),
    ])

    params = init_params(kp, graph_layer_sizes, hidden_layer_sizes)

    out = gnn_forward(params, x, edge_index, batch, num_graphs)
    out = jax.block_until_ready(out)
    assert out.shape == (num_graphs, 1)
    print("KERNEL_OK")
</pallas_src>

<mosaic_0001>
module attributes {stable_mosaic.version = 11 : i64} {
  func.func @_fused_gnn_kernel(%arg0: memref<16x16xbf16, #tpu.memory_space<vmem>>, %arg1: memref<16x8xbf16, #tpu.memory_space<vmem>>, %arg2: memref<8x32xbf16, #tpu.memory_space<vmem>>, %arg3: memref<1x32xf32, #tpu.memory_space<vmem>>, %arg4: memref<32x32xbf16, #tpu.memory_space<vmem>>, %arg5: memref<1x32xf32, #tpu.memory_space<vmem>>, %arg6: memref<2x16xf32, #tpu.memory_space<vmem>>, %arg7: memref<32x16xf32, #tpu.memory_space<vmem>>, %arg8: memref<1x16xf32, #tpu.memory_space<vmem>>, %arg9: memref<16x128xf32, #tpu.memory_space<vmem>>, %arg10: memref<1x128xf32, #tpu.memory_space<vmem>>, %arg11: memref<2x128xf32, #tpu.memory_space<vmem>>) attributes {dimension_semantics = [], scalar_prefetch = 0 : i64, scratch_operands = 0 : i64, tpu.core_type = #tpu.core_type<tc>} {
    %c0 = arith.constant 0 : index
    %c0_0 = arith.constant 0 : index
    %0 = vector.load %arg0[%c0, %c0_0] : memref<16x16xbf16, #tpu.memory_space<vmem>>, vector<16x16xbf16>
    %c0_1 = arith.constant 0 : index
    %c0_2 = arith.constant 0 : index
    %1 = vector.load %arg1[%c0_1, %c0_2] : memref<16x8xbf16, #tpu.memory_space<vmem>>, vector<16x8xbf16>
    %c0_3 = arith.constant 0 : index
    %c0_4 = arith.constant 0 : index
    %2 = vector.load %arg2[%c0_3, %c0_4] : memref<8x32xbf16, #tpu.memory_space<vmem>>, vector<8x32xbf16>
    %c0_5 = arith.constant 0 : index
    %c0_6 = arith.constant 0 : index
    %3 = vector.load %arg3[%c0_5, %c0_6] : memref<1x32xf32, #tpu.memory_space<vmem>>, vector<1x32xf32>
    %cst = arith.constant dense<0.000000e+00> : vector<16x8xf32>
    %4 = tpu.matmul %0, %1, %cst {dimension_numbers = #tpu.dot_dimension_numbers<[1], [0], [0], [1], [0, 0, 1, 1], [], []>} : vector<16x16xbf16>, vector<16x8xbf16>, vector<16x8xf32> -> vector<16x8xf32>
    %5 = arith.truncf %4 : vector<16x8xf32> to vector<16x8xbf16>
    %cst_7 = arith.constant dense<0.000000e+00> : vector<16x32xf32>
    %6 = tpu.matmul %5, %2, %cst_7 {dimension_numbers = #tpu.dot_dimension_numbers<[1], [0], [0], [1], [0, 0, 1, 1], [], []>} : vector<16x8xbf16>, vector<8x32xbf16>, vector<16x32xf32> -> vector<16x32xf32>
    %7 = vector.broadcast %3 : vector<1x32xf32> to vector<16x32xf32>
    %8 = arith.addf %6, %7 : vector<16x32xf32>
    %cst_8 = arith.constant 0.000000e+00 : f32
    %9 = vector.broadcast %cst_8 : f32 to vector<16x32xf32>
    %10 = arith.maximumf %8, %9 : vector<16x32xf32>
    %c0_9 = arith.constant 0 : index
    %c0_10 = arith.constant 0 : index
    %11 = vector.load %arg4[%c0_9, %c0_10] : memref<32x32xbf16, #tpu.memory_space<vmem>>, vector<32x32xbf16>
    %c0_11 = arith.constant 0 : index
    %c0_12 = arith.constant 0 : index
    %12 = vector.load %arg5[%c0_11, %c0_12] : memref<1x32xf32, #tpu.memory_space<vmem>>, vector<1x32xf32>
    %13 = arith.truncf %10 : vector<16x32xf32> to vector<16x32xbf16>
    %cst_13 = arith.constant dense<0.000000e+00> : vector<16x32xf32>
    %14 = tpu.matmul %13, %11, %cst_13 {dimension_numbers = #tpu.dot_dimension_numbers<[1], [0], [0], [1], [0, 0, 1, 1], [], []>} : vector<16x32xbf16>, vector<32x32xbf16>, vector<16x32xf32> -> vector<16x32xf32>
    %15 = arith.truncf %14 : vector<16x32xf32> to vector<16x32xbf16>
    %cst_14 = arith.constant dense<0.000000e+00> : vector<16x32xf32>
    %16 = tpu.matmul %0, %15, %cst_14 {dimension_numbers = #tpu.dot_dimension_numbers<[1], [0], [0], [1], [0, 0, 1, 1], [], []>} : vector<16x16xbf16>, vector<16x32xbf16>, vector<16x32xf32> -> vector<16x32xf32>
    %17 = vector.broadcast %12 : vector<1x32xf32> to vector<16x32xf32>
    %18 = arith.addf %16, %17 : vector<16x32xf32>
    %cst_15 = arith.constant 0.000000e+00 : f32
    %19 = vector.broadcast %cst_15 : f32 to vector<16x32xf32>
    %20 = arith.maximumf %18, %19 : vector<16x32xf32>
    %c0_16 = arith.constant 0 : index
    %c0_17 = arith.constant 0 : index
    %21 = vector.load %arg6[%c0_16, %c0_17] : memref<2x16xf32, #tpu.memory_space<vmem>>, vector<2x16xf32>
    %cst_18 = arith.constant dense<0.000000e+00> : vector<2x32xf32>
    %22 = tpu.matmul %21, %20, %cst_18 {dimension_numbers = #tpu.dot_dimension_numbers<[1], [0], [0], [1], [0, 0, 1, 1], [], []>} : vector<2x16xf32>, vector<16x32xf32>, vector<2x32xf32> -> vector<2x32xf32>
    %c0_19 = arith.constant 0 : index
    %c0_20 = arith.constant 0 : index
    %23 = vector.load %arg7[%c0_19, %c0_20] : memref<32x16xf32, #tpu.memory_space<vmem>>, vector<32x16xf32>
    %cst_21 = arith.constant dense<0.000000e+00> : vector<2x16xf32>
    %24 = tpu.matmul %22, %23, %cst_21 {dimension_numbers = #tpu.dot_dimension_numbers<[1], [0], [0], [1], [0, 0, 1, 1], [], []>} : vector<2x32xf32>, vector<32x16xf32>, vector<2x16xf32> -> vector<2x16xf32>
    %c0_22 = arith.constant 0 : index
    %c0_23 = arith.constant 0 : index
    %25 = vector.load %arg8[%c0_22, %c0_23] : memref<1x16xf32, #tpu.memory_space<vmem>>, vector<1x16xf32>
    %26 = vector.broadcast %25 : vector<1x16xf32> to vector<2x16xf32>
    %27 = arith.addf %24, %26 : vector<2x16xf32>
    %cst_24 = arith.constant 0.000000e+00 : f32
    %28 = vector.broadcast %cst_24 : f32 to vector<2x16xf32>
    %29 = arith.maximumf %27, %28 : vector<2x16xf32>
    %c0_25 = arith.constant 0 : index
    %c0_26 = arith.constant 0 : index
    %30 = vector.load %arg9[%c0_25, %c0_26] : memref<16x128xf32, #tpu.memory_space<vmem>>, vector<16x128xf32>
    %cst_27 = arith.constant dense<0.000000e+00> : vector<2x128xf32>
    %31 = tpu.matmul %29, %30, %cst_27 {dimension_numbers = #tpu.dot_dimension_numbers<[1], [0], [0], [1], [0, 0, 1, 1], [], []>} : vector<2x16xf32>, vector<16x128xf32>, vector<2x128xf32> -> vector<2x128xf32>
    %c0_28 = arith.constant 0 : index
    %c0_29 = arith.constant 0 : index
    %32 = vector.load %arg10[%c0_28, %c0_29] : memref<1x128xf32, #tpu.memory_space<vmem>>, vector<1x128xf32>
    %33 = vector.broadcast %32 : vector<1x128xf32> to vector<2x128xf32>
    %34 = arith.addf %31, %33 : vector<2x128xf32>
    %c0_30 = arith.constant 0 : index
    %c0_31 = arith.constant 0 : index
    %35 = vector.load %arg11[%c0_30, %c0_31] : memref<2x128xf32, #tpu.memory_space<vmem>>, vector<2x128xf32>
    tpu.vector_store %arg11[%c0_30, %c0_31], %34 {strides = array<i32>} : memref<2x128xf32, #tpu.memory_space<vmem>>, vector<2x128xf32>,
    return
  }
}

</mosaic_0001>

<llo_original>
// kernel: tpu_custom_call.1
$region0: #{tpu_custom_call.1}
  #allocation0 [shape = 'u32[]', space=smem, size = 0x4, offset = 0x4, fixed_abs, tag = 'smem constant byte address 0x4 - core index']
  #allocation1 [shape = 'u32[144,128]{1,0:T(1,128)}', space=vmem, size = 0x12000, scoped, tag = 'internal scratch']
  %s0 = inlined_call_operand.vmem [shape: bf16[16,16], index: 0, kind: input, shape index: {}]
  %s1 = inlined_call_operand.vmem [shape: bf16[16,8], index: 1, kind: input, shape index: {}]
  %s2 = inlined_call_operand.vmem [shape: bf16[8,32], index: 2, kind: input, shape index: {}]
  %s3 = inlined_call_operand.vmem [shape: f32[1,32], index: 3, kind: input, shape index: {}]
  %s4 = inlined_call_operand.vmem [shape: bf16[32,32], index: 4, kind: input, shape index: {}]
  %s5 = inlined_call_operand.vmem [shape: f32[1,32], index: 5, kind: input, shape index: {}]
  %s6 = inlined_call_operand.vmem [shape: f32[2,16], index: 6, kind: input, shape index: {}]
  %s7 = inlined_call_operand.vmem [shape: f32[32,16], index: 7, kind: input, shape index: {}]
  %s8 = inlined_call_operand.vmem [shape: f32[1,16], index: 8, kind: input, shape index: {}]
  %s9 = inlined_call_operand.vmem [shape: f32[16,128], index: 9, kind: input, shape index: {}]
  %s10 = inlined_call_operand.vmem [shape: f32[1,128], index: 10, kind: input, shape index: {}]
  %s11 = inlined_call_operand.hbm [shape: f32[2,128], index: 11, kind: output, shape index: {}]
  %s12 = sld [smem:[#allocation0]]
  $region54: #{tpu_custom_call.1} parent=0
    _
  %s14 = ssub.s32 1, %s12
  %s15 = scalar_select 0, %s14, %s12
  $region1: #{tpu_custom_call.1} parent=0
    #allocation2 [shape = 'u8[1024]{0}', space=vmem, size = 0x400, scoped, tag = 'output window, operand 0, single buffered']
    #allocation3 [shape = 's32[1]{0}', space=sflag, size = 0x4, scoped, tag = 'scoped memory for tpu_custom_call.1']
    %16 = vsyncpa [#allocation3], 0
    // Predicated region
    $region2: #{tpu_custom_call.1} parent=1 // pred_check
      _
    $region3: #{tpu_custom_call.1} parent=1 // pred_check_branch
      %18 = sbr.rel (0) target = $region5
    $region4: #{tpu_custom_call.1} parent=1 // pred_region
      _
    $region5: #{tpu_custom_call.1} parent=1 // pred_fallthru
      _
    // Predicated region
    $region6: #{tpu_custom_call.1} parent=1 // pred_check
      _
    $region7: #{tpu_custom_call.1} parent=1 // pred_check_branch
      %20 = sbr.rel (0) target = $region9
    $region8: #{tpu_custom_call.1} parent=1 // pred_region
      _
    $region9: #{tpu_custom_call.1} parent=1 // pred_fallthru
      _
    // Predicated region
    $region10: #{tpu_custom_call.1} parent=1 // pred_check
      _
    $region11: #{tpu_custom_call.1} parent=1 // pred_check_branch
      %22 = sbr.rel (0) target = $region13
    $region12: #{tpu_custom_call.1} parent=1 // pred_region
      _
    $region13: #{tpu_custom_call.1} parent=1 // pred_fallthru
      _
    // Predicated region
    $region14: #{tpu_custom_call.1} parent=1 // pred_check
      _
    $region15: #{tpu_custom_call.1} parent=1 // pred_check_branch
      %24 = sbr.rel (0) target = $region17
    $region16: #{tpu_custom_call.1} parent=1 // pred_region
      _
    $region17: #{tpu_custom_call.1} parent=1 // pred_fallthru
      _
    // Predicated region
    $region18: #{tpu_custom_call.1} parent=1 // pred_check
      _
    $region19: #{tpu_custom_call.1} parent=1 // pred_check_branch
      %26 = sbr.rel (0) target = $region21
    $region20: #{tpu_custom_call.1} parent=1 // pred_region
      _
    $region21: #{tpu_custom_call.1} parent=1 // pred_fallthru
      _
    // Predicated region
    $region22: #{tpu_custom_call.1} parent=1 // pred_check
      _
    $region23: #{tpu_custom_call.1} parent=1 // pred_check_branch
      %28 = sbr.rel (0) target = $region25
    $region24: #{tpu_custom_call.1} parent=1 // pred_region
      _
    $region25: #{tpu_custom_call.1} parent=1 // pred_fallthru
      _
    // Predicated region
    $region26: #{tpu_custom_call.1} parent=1 // pred_check
      _
    $region27: #{tpu_custom_call.1} parent=1 // pred_check_branch
      %30 = sbr.rel (0) target = $region29
    $region28: #{tpu_custom_call.1} parent=1 // pred_region
      _
    $region29: #{tpu_custom_call.1} parent=1 // pred_fallthru
      _
    // Predicated region
    $region30: #{tpu_custom_call.1} parent=1 // pred_check
      _
    $region31: #{tpu_custom_call.1} parent=1 // pred_check_branch
      %32 = sbr.rel (0) target = $region33
    $region32: #{tpu_custom_call.1} parent=1 // pred_region
      _
    $region33: #{tpu_custom_call.1} parent=1 // pred_fallthru
      _
    // Predicated region
    $region34: #{tpu_custom_call.1} parent=1 // pred_check
      _
    $region35: #{tpu_custom_call.1} parent=1 // pred_check_branch
      %34 = sbr.rel (0) target = $region37
    $region36: #{tpu_custom_call.1} parent=1 // pred_region
      _
    $region37: #{tpu_custom_call.1} parent=1 // pred_fallthru
      _
    // Predicated region
    $region38: #{tpu_custom_call.1} parent=1 // pred_check
      _
    $region39: #{tpu_custom_call.1} parent=1 // pred_check_branch
      %36 = sbr.rel (0) target = $region41
    $region40: #{tpu_custom_call.1} parent=1 // pred_region
      _
    $region41: #{tpu_custom_call.1} parent=1 // pred_fallthru
      _
    // Predicated region
    $region42: #{tpu_custom_call.1} parent=1 // pred_check
      _
    $region43: #{tpu_custom_call.1} parent=1 // pred_check_branch
      %38 = sbr.rel (0) target = $region45
    $region44: #{tpu_custom_call.1} parent=1 // pred_region
      _
    $region45: #{tpu_custom_call.1} parent=1 // pred_fallthru
      _
    %v40 = vld [vmem:[%s0] sm:$0xf]
    %v41 = vld [vmem:[%s0 + $0x4] sm:$0xf]
    %v42 = vld [vmem:[%s1] sm:$0xf]
    %v43 = vld [vmem:[%s1 + $0x4] sm:$0xf]
    %v44 = vld [vmem:[%s2] sm:$0xf]
    %v45 = vld [vmem:[%s3] sm:$0x1]
    %v48 = vunpack.c.l.b16 %v40
    %v49 = vunpack.c.l.b16 %v41
    %v50 = vpack.c.b16 %v49, %v48
    %v53 = vunpack.c.l.b16 %v42
    %v54 = vunpack.c.l.b16 %v43
    %v55 = vpack.c.b16 %v54, %v53
    %vm57 = vcmask 130048
    %v59 = vsel %vm57, %v50, 0
    %61 = vmatprep.subr.bf16.mxu0 0
    %62 = vmatpush1.bf16.msra.mxu0 0
    %63 = vmatprep.subr.bf16.mxu0 0
    %64 = vmatpush1.bf16.msra.mxu0 0
    %65 = vmatprep.subr.bf16.mxu0 0
    %66 = vmatpush1.bf16.msra.mxu0 0
    %67 = vmatprep.subr.bf16.mxu0 0
    %68 = vmatpush1.bf16.msra.mxu0 0
    %69 = vmatprep.subr.bf16.mxu0 0
    %70 = vmatpush1.bf16.msra.mxu0 0
    %71 = vmatprep.subr.bf16.mxu0 0
    %72 = vmatpush1.bf16.msra.mxu0 0
    %73 = vmatprep.subr.bf16.mxu0 0
    %74 = vmatpush1.bf16.msra.mxu0 0
    %75 = vmatprep.subr.bf16.mxu0 0
    %76 = vmatpush1.bf16.msra.mxu0 %v55
    %77 = vmatprep.subr.bf16.mxu0 0
    %78 = vmatpush2.bf16.msra.mxu0 0
    %79 = vmatprep.subr.bf16.mxu0 0
    %80 = vmatpush2.bf16.msra.mxu0 0
    %81 = vmatprep.subr.bf16.mxu0 0
    %82 = vmatpush2.bf16.msra.mxu0 0
    %83 = vmatprep.subr.bf16.mxu0 0
    %84 = vmatpush2.bf16.msra.mxu0 0
    %85 = vmatprep.subr.bf16.mxu0 0
    %86 = vmatpush2.bf16.msra.mxu0 0
    %87 = vmatprep.subr.bf16.mxu0 0
    %88 = vmatpush2.bf16.msra.mxu0 0
    %89 = vmatprep.subr.bf16.mxu0 0
    %90 = vmatpush2.bf16.msra.mxu0 0
    %91 = vmatprep.subr.bf16.mxu0 0
    %92 = vmatpush2.bf16.msra.mxu0 0
    %93 = vmatprep.mubr.bf16.mxu0 0
    %94 = vmatmul.mubr.bf16.gmra.mxu0 %v59
    %v95 = vpop.f32.mrf.mxu0
    %v96 = vadd.f32 0.0, %v95
    %v97 = vpop.f32.mrf.mxu0
    %v98 = vpop.f32.mrf.mxu0
    %v99 = vadd.f32 0.0, %v98
    %v100 = vpop.f32.mrf.mxu0
    %101 = vdwg.mxu0
    %v102 = vpack.c.bf16 %v99, %v96
    %v104 = vlaneseq
    %v105 = vshrl.u32 %v104, 7
    %v106 = vsub.s32 0, %v105
    %v107 = vrot.slane %v45, %v106
    %vm109 = vcmask 64512
    %v111 = vsel %vm109, %v102, 0
    %vm113 = vcmask 1043456
    %v115 = vsel %vm113, %v44, 0
    %117 = vmatprep.subr.bf16.mxu0 0
    %118 = vmatpush1.bf16.msra.mxu0 0
    %119 = vmatprep.subr.bf16.mxu0 0
    %120 = vmatpush1.bf16.msra.mxu0 0
    %121 = vmatprep.subr.bf16.mxu0 0
    %122 = vmatpush1.bf16.msra.mxu0 0
    %123 = vmatprep.subr.bf16.mxu0 0
    %124 = vmatpush1.bf16.msra.mxu0 0
    %125 = vmatprep.subr.bf16.mxu0 0
    %126 = vmatpush1.bf16.msra.mxu0 0
    %127 = vmatprep.subr.bf16.mxu0 0
    %128 = vmatpush1.bf16.msra.mxu0 0
    %129 = vmatprep.subr.bf16.mxu0 0
    %130 = vmatpush1.bf16.msra.mxu0 0
    %131 = vmatprep.subr.bf16.mxu0 0
    %132 = vmatpush1.bf16.msra.mxu0 %v115
    %133 = vmatprep.subr.bf16.mxu0 0
    %134 = vmatpush2.bf16.msra.mxu0 0
    %135 = vmatprep.subr.bf16.mxu0 0
    %136 = vmatpush2.bf16.msra.mxu0 0
    %137 = vmatprep.subr.bf16.mxu0 0
    %138 = vmatpush2.bf16.msra.mxu0 0
    %139 = vmatprep.subr.bf16.mxu0 0
    %140 = vmatpush2.bf16.msra.mxu0 0
    %141 = vmatprep.subr.bf16.mxu0 0
    %142 = vmatpush2.bf16.msra.mxu0 0
    %143 = vmatprep.subr.bf16.mxu0 0
    %144 = vmatpush2.bf16.msra.mxu0 0
    %145 = vmatprep.subr.bf16.mxu0 0
    %146 = vmatpush2.bf16.msra.mxu0 0
    %147 = vmatprep.subr.bf16.mxu0 0
    %148 = vmatpush2.bf16.msra.mxu0 0
    %149 = vmatprep.mubr.bf16.mxu0 0
    %150 = vmatmul.mubr.bf16.gmra.mxu0 %v111
    %v151 = vpop.f32.mrf.mxu0
    %v152 = vadd.f32 %v107, %v151
    %v153 = vpop.f32.mrf.mxu0
    %v154 = vpop.f32.mrf.mxu0
    %v155 = vadd.f32 %v107, %v154
    %v156 = vpop.f32.mrf.mxu0
    %157 = vdwg.mxu0
    %v158 = vmax.f32 %v152, 0.0
    %v159 = vmax.f32 %v155, 0.0
    %v160 = vld [vmem:[%s4] sm:$0xf]
    %v161 = vld [vmem:[%s4 + $0x4] sm:$0xf]
    %v162 = vld [vmem:[%s4 + $0x8] sm:$0xf]
    %v163 = vld [vmem:[%s4 + $0xc] sm:$0xf]
    %v164 = vld [vmem:[%s5] sm:$0x1]
    %v165 = vpack.c.bf16 %v159, %v158
    %v170 = vunpack.c.l.b16 %v160
    %v171 = vunpack.c.l.b16 %v161
    %v172 = vunpack.c.l.b16 %v162
    %v173 = vunpack.c.l.b16 %v163
    %v174 = vpack.c.b16 %v171, %v170
    %v175 = vpack.c.b16 %v173, %v172
    %vm178 = vcmask 261120
    %v180 = vsel %vm178, %v165, 0
    %182 = vmatprep.subr.bf16.mxu0 0
    %183 = vmatpush1.bf16.msra.mxu0 0
    %184 = vmatprep.subr.bf16.mxu0 0
    %185 = vmatpush1.bf16.msra.mxu0 0
    %186 = vmatprep.subr.bf16.mxu0 0
    %187 = vmatpush1.bf16.msra.mxu0 0
    %188 = vmatprep.subr.bf16.mxu0 0
    %189 = vmatpush1.bf16.msra.mxu0 0
    %190 = vmatprep.subr.bf16.mxu0 0
    %191 = vmatpush1.bf16.msra.mxu0 0
    %192 = vmatprep.subr.bf16.mxu0 0
    %193 = vmatpush1.bf16.msra.mxu0 0
    %194 = vmatprep.subr.bf16.mxu0 0
    %195 = vmatpush1.bf16.msra.mxu0 %v175
    %196 = vmatprep.subr.bf16.mxu0 0
    %197 = vmatpush1.bf16.msra.mxu0 %v174
    %198 = vmatprep.subr.bf16.mxu0 0
    %199 = vmatpush2.bf16.msra.mxu0 0
    %200 = vmatprep.subr.bf16.mxu0 0
    %201 = vmatpush2.bf16.msra.mxu0 0
    %202 = vmatprep.subr.bf16.mxu0 0
    %203 = vmatpush2.bf16.msra.mxu0 0
    %204 = vmatprep.subr.bf16.mxu0 0
    %205 = vmatpush2.bf16.msra.mxu0 0
    %206 = vmatprep.subr.bf16.mxu0 0
    %207 = vmatpush2.bf16.msra.mxu0 0
    %208 = vmatprep.subr.bf16.mxu0 0
    %209 = vmatpush2.bf16.msra.mxu0 0
    %210 = vmatprep.subr.bf16.mxu0 0
    %211 = vmatpush2.bf16.msra.mxu0 0
    %212 = vmatprep.subr.bf16.mxu0 0
    %213 = vmatpush2.bf16.msra.mxu0 0
    %214 = vmatprep.mubr.bf16.mxu0 0
    %215 = vmatmul.mubr.bf16.gmra.mxu0 %v180
    %v216 = vpop.f32.mrf.mxu0
    %v217 = vadd.f32 0.0, %v216
    %v218 = vpop.f32.mrf.mxu0
    %v219 = vpop.f32.mrf.mxu0
    %v220 = vadd.f32 0.0, %v219
    %v221 = vpop.f32.mrf.mxu0
    %222 = vdwg.mxu0
    %v223 = vpack.c.bf16 %v220, %v217
    %v225 = vlaneseq
    %v226 = vshrl.u32 %v225, 7
    %v227 = vsub.s32 0, %v226
    %v228 = vrot.slane %v164, %v227
    %230 = vmatprep.subr.bf16.mxu0 0
    %231 = vmatpush1.bf16.msra.mxu0 0
    %232 = vmatprep.subr.bf16.mxu0 0
    %233 = vmatpush1.bf16.msra.mxu0 0
    %234 = vmatprep.subr.bf16.mxu0 0
    %235 = vmatpush1.bf16.msra.mxu0 0
    %236 = vmatprep.subr.bf16.mxu0 0
    %237 = vmatpush1.bf16.msra.mxu0 0
    %238 = vmatprep.subr.bf16.mxu0 0
    %239 = vmatpush1.bf16.msra.mxu0 0
    %240 = vmatprep.subr.bf16.mxu0 0
    %241 = vmatpush1.bf16.msra.mxu0 0
    %242 = vmatprep.subr.bf16.mxu0 0
    %243 = vmatpush1.bf16.msra.mxu0 0
    %244 = vmatprep.subr.bf16.mxu0 0
    %245 = vmatpush1.bf16.msra.mxu0 %v223
    %246 = vmatprep.subr.bf16.mxu0 0
    %247 = vmatpush2.bf16.msra.mxu0 0
    %248 = vmatprep.subr.bf16.mxu0 0
    %249 = vmatpush2.bf16.msra.mxu0 0
    %250 = vmatprep.subr.bf16.mxu0 0
    %251 = vmatpush2.bf16.msra.mxu0 0
    %252 = vmatprep.subr.bf16.mxu0 0
    %253 = vmatpush2.bf16.msra.mxu0 0
    %254 = vmatprep.subr.bf16.mxu0 0
    %255 = vmatpush2.bf16.msra.mxu0 0
    %256 = vmatprep.subr.bf16.mxu0 0
    %257 = vmatpush2.bf16.msra.mxu0 0
    %258 = vmatprep.subr.bf16.mxu0 0
    %259 = vmatpush2.bf16.msra.mxu0 0
    %260 = vmatprep.subr.bf16.mxu0 0
    %261 = vmatpush2.bf16.msra.mxu0 0
    %262 = vmatprep.mubr.bf16.mxu0 0
    %263 = vmatmul.mubr.bf16.gmra.mxu0 %v59
    %v264 = vpop.f32.mrf.mxu0
    %v265 = vadd.f32 %v228, %v264
    %v266 = vpop.f32.mrf.mxu0
    %v267 = vpop.f32.mrf.mxu0
    %v268 = vadd.f32 %v228, %v267
    %v269 = vpop.f32.mrf.mxu0
    %270 = vdwg.mxu0
    %v271 = vmax.f32 %v265, 0.0
    %v272 = vmax.f32 %v268, 0.0
    %v273 = vld [vmem:[%s6] sm:$0x3]
    %v275 = vsel %vm57, %v273, 0
    %277 = vmatprep.subr.mxu0 0.0
    %278 = vmatpush1.msra.mxu0 0.0
    %279 = vmatprep.subr.mxu0 0.0
    %280 = vmatpush1.msra.mxu0 0.0
    %281 = vmatprep.subr.mxu0 0.0
    %282 = vmatpush1.msra.mxu0 0.0
    %283 = vmatprep.subr.mxu0 0.0
    %284 = vmatpush1.msra.mxu0 0.0
    %285 = vmatprep.subr.mxu0 0.0
    %286 = vmatpush1.msra.mxu0 0.0
    %287 = vmatprep.subr.mxu0 0.0
    %288 = vmatpush1.msra.mxu0 0.0
    %289 = vmatprep.subr.mxu0 0.0
    %290 = vmatpush1.msra.mxu0 0.0
    %291 = vmatprep.subr.mxu0 0.0
    %292 = vmatpush1.msra.mxu0 0.0
    %293 = vmatprep.subr.mxu0 0.0
    %294 = vmatpush1.msra.mxu0 0.0
    %295 = vmatprep.subr.mxu0 0.0
    %296 = vmatpush1.msra.mxu0 0.0
    %297 = vmatprep.subr.mxu0 0.0
    %298 = vmatpush1.msra.mxu0 0.0
    %299 = vmatprep.subr.mxu0 0.0
    %300 = vmatpush1.msra.mxu0 0.0
    %301 = vmatprep.subr.mxu0 0.0
    %302 = vmatpush1.msra.mxu0 0.0
    %303 = vmatprep.subr.mxu0 0.0
    %304 = vmatpush1.msra.mxu0 0.0
    %305 = vmatprep.subr.mxu0 0.0
    %306 = vmatpush1.msra.mxu0 %v272
    %307 = vmatprep.subr.mxu0 0.0
    %308 = vmatpush1.msra.mxu0 %v271
    %309 = vmatprep.subr.mxu0 0.0
    %310 = vmatpush2.msra.mxu0 0.0
    %311 = vmatprep.subr.mxu0 0.0
    %312 = vmatpush2.msra.mxu0 0.0
    %313 = vmatprep.subr.mxu0 0.0
    %314 = vmatpush2.msra.mxu0 0.0
    %315 = vmatprep.subr.mxu0 0.0
    %316 = vmatpush2.msra.mxu0 0.0
    %317 = vmatprep.subr.mxu0 0.0
    %318 = vmatpush2.msra.mxu0 0.0
    %319 = vmatprep.subr.mxu0 0.0
    %320 = vmatpush2.msra.mxu0 0.0
    %321 = vmatprep.subr.mxu0 0.0
    %322 = vmatpush2.msra.mxu0 0.0
    %323 = vmatprep.subr.mxu0 0.0
    %324 = vmatpush2.msra.mxu0 0.0
    %325 = vmatprep.subr.mxu0 0.0
    %326 = vmatpush2.msra.mxu0 0.0
    %327 = vmatprep.subr.mxu0 0.0
    %328 = vmatpush2.msra.mxu0 0.0
    %329 = vmatprep.subr.mxu0 0.0
    %330 = vmatpush2.msra.mxu0 0.0
    %331 = vmatprep.subr.mxu0 0.0
    %332 = vmatpush2.msra.mxu0 0.0
    %333 = vmatprep.subr.mxu0 0.0
    %334 = vmatpush2.msra.mxu0 0.0
    %335 = vmatprep.subr.mxu0 0.0
    %336 = vmatpush2.msra.mxu0 0.0
    %337 = vmatprep.subr.mxu0 0.0
    %338 = vmatpush2.msra.mxu0 0.0
    %339 = vmatprep.subr.mxu0 0.0
    %340 = vmatpush2.msra.mxu0 0.0
    %341 = vmatprep.mubr.f32.mxu0 0.0
    %342 = vmatmul.mubr.f32.gmra.mxu0 %v275
    %v343 = vpop.f32.mrf.mxu0
    %v344 = vadd.f32 0.0, %v343
    %v345 = vpop.f32.mrf.mxu0
    %346 = vdwg.mxu0
    %v347 = vld [vmem:[%s7] sm:$0xff]
    %v348 = vld [vmem:[%s7 + $0x8] sm:$0xff]
    %v349 = vld [vmem:[%s7 + $0x10] sm:$0xff]
    %v350 = vld [vmem:[%s7 + $0x18] sm:$0xff]
    %v351 = vld [vmem:[%s8] sm:$0x1]
    %v353 = vlaneseq
    %v354 = vshrl.u32 %v353, 7
    %v355 = vsub.s32 0, %v354
    %v356 = vrot.slane %v351, %v355
    %v359 = vsel %vm178, %v344, 0
    %361 = vmatprep.subr.mxu0 0.0
    %362 = vmatpush1.msra.mxu0 0.0
    %363 = vmatprep.subr.mxu0 0.0
    %364 = vmatpush1.msra.mxu0 0.0
    %365 = vmatprep.subr.mxu0 0.0
    %366 = vmatpush1.msra.mxu0 0.0
    %367 = vmatprep.subr.mxu0 0.0
    %368 = vmatpush1.msra.mxu0 0.0
    %369 = vmatprep.subr.mxu0 0.0
    %370 = vmatpush1.msra.mxu0 0.0
    %371 = vmatprep.subr.mxu0 0.0
    %372 = vmatpush1.msra.mxu0 0.0
    %373 = vmatprep.subr.mxu0 0.0
    %374 = vmatpush1.msra.mxu0 0.0
    %375 = vmatprep.subr.mxu0 0.0
    %376 = vmatpush1.msra.mxu0 0.0
    %377 = vmatprep.subr.mxu0 0.0
    %378 = vmatpush1.msra.mxu0 0.0
    %379 = vmatprep.subr.mxu0 0.0
    %380 = vmatpush1.msra.mxu0 0.0
    %381 = vmatprep.subr.mxu0 0.0
    %382 = vmatpush1.msra.mxu0 0.0
    %383 = vmatprep.subr.mxu0 0.0
    %384 = vmatpush1.msra.mxu0 0.0
    %385 = vmatprep.subr.mxu0 0.0
    %386 = vmatpush1.msra.mxu0 %v350
    %387 = vmatprep.subr.mxu0 0.0
    %388 = vmatpush1.msra.mxu0 %v349
    %389 = vmatprep.subr.mxu0 0.0
    %390 = vmatpush1.msra.mxu0 %v348
    %391 = vmatprep.subr.mxu0 0.0
    %392 = vmatpush1.msra.mxu0 %v347
    %393 = vmatprep.subr.mxu0 0.0
    %394 = vmatpush2.msra.mxu0 0.0
    %395 = vmatprep.subr.mxu0 0.0
    %396 = vmatpush2.msra.mxu0 0.0
    %397 = vmatprep.subr.mxu0 0.0
    %398 = vmatpush2.msra.mxu0 0.0
    %399 = vmatprep.subr.mxu0 0.0
    %400 = vmatpush2.msra.mxu0 0.0
    %401 = vmatprep.subr.mxu0 0.0
    %402 = vmatpush2.msra.mxu0 0.0
    %403 = vmatprep.subr.mxu0 0.0
    %404 = vmatpush2.msra.mxu0 0.0
    %405 = vmatprep.subr.mxu0 0.0
    %406 = vmatpush2.msra.mxu0 0.0
    %407 = vmatprep.subr.mxu0 0.0
    %408 = vmatpush2.msra.mxu0 0.0
    %409 = vmatprep.subr.mxu0 0.0
    %410 = vmatpush2.msra.mxu0 0.0
    %411 = vmatprep.subr.mxu0 0.0
    %412 = vmatpush2.msra.mxu0 0.0
    %413 = vmatprep.subr.mxu0 0.0
    %414 = vmatpush2.msra.mxu0 0.0
    %415 = vmatprep.subr.mxu0 0.0
    %416 = vmatpush2.msra.mxu0 0.0
    %417 = vmatprep.subr.mxu0 0.0
    %418 = vmatpush2.msra.mxu0 0.0
    %419 = vmatprep.subr.mxu0 0.0
    %420 = vmatpush2.msra.mxu0 0.0
    %421 = vmatprep.subr.mxu0 0.0
    %422 = vmatpush2.msra.mxu0 0.0
    %423 = vmatprep.subr.mxu0 0.0
    %424 = vmatpush2.msra.mxu0 0.0
    %425 = vmatprep.mubr.f32.mxu0 0.0
    %426 = vmatmul.mubr.f32.gmra.mxu0 %v359
    %v427 = vpop.f32.mrf.mxu0
    %v428 = vadd.f32 %v356, %v427
    %v429 = vpop.f32.mrf.mxu0
    %430 = vdwg.mxu0
    %v431 = vmax.f32 %v428, 0.0
    %v432 = vld [vmem:[%s9] sm:$0xff]
    %v433 = vld [vmem:[%s9 + $0x8] sm:$0xff]
    %v434 = vld [vmem:[%s10] sm:$0x1]
    %v436 = vlaneseq
    %v437 = vshrl.u32 %v436, 7
    %v438 = vsub.s32 0, %v437
    %v439 = vrot.slane %v434, %v438
    %v442 = vsel %vm57, %v431, 0
    %444 = vmatprep.subr.mxu0 0.0
    %445 = vmatpush1.msra.mxu0 0.0
    %446 = vmatprep.subr.mxu0 0.0
    %447 = vmatpush1.msra.mxu0 0.0
    %448 = vmatprep.subr.mxu0 0.0
    %449 = vmatpush1.msra.mxu0 0.0
    %450 = vmatprep.subr.mxu0 0.0
    %451 = vmatpush1.msra.mxu0 0.0
    %452 = vmatprep.subr.mxu0 0.0
    %453 = vmatpush1.msra.mxu0 0.0
    %454 = vmatprep.subr.mxu0 0.0
    %455 = vmatpush1.msra.mxu0 0.0
    %456 = vmatprep.subr.mxu0 0.0
    %457 = vmatpush1.msra.mxu0 0.0
    %458 = vmatprep.subr.mxu0 0.0
    %459 = vmatpush1.msra.mxu0 0.0
    %460 = vmatprep.subr.mxu0 0.0
    %461 = vmatpush1.msra.mxu0 0.0
    %462 = vmatprep.subr.mxu0 0.0
    %463 = vmatpush1.msra.mxu0 0.0
    %464 = vmatprep.subr.mxu0 0.0
    %465 = vmatpush1.msra.mxu0 0.0
    %466 = vmatprep.subr.mxu0 0.0
    %467 = vmatpush1.msra.mxu0 0.0
    %468 = vmatprep.subr.mxu0 0.0
    %469 = vmatpush1.msra.mxu0 0.0
    %470 = vmatprep.subr.mxu0 0.0
    %471 = vmatpush1.msra.mxu0 0.0
    %472 = vmatprep.subr.mxu0 0.0
    %473 = vmatpush1.msra.mxu0 %v433
    %474 = vmatprep.subr.mxu0 0.0
    %475 = vmatpush1.msra.mxu0 %v432
    %476 = vmatprep.subr.mxu0 0.0
    %477 = vmatpush2.msra.mxu0 0.0
    %478 = vmatprep.subr.mxu0 0.0
    %479 = vmatpush2.msra.mxu0 0.0
    %480 = vmatprep.subr.mxu0 0.0
    %481 = vmatpush2.msra.mxu0 0.0
    %482 = vmatprep.subr.mxu0 0.0
    %483 = vmatpush2.msra.mxu0 0.0
    %484 = vmatprep.subr.mxu0 0.0
    %485 = vmatpush2.msra.mxu0 0.0
    %486 = vmatprep.subr.mxu0 0.0
    %487 = vmatpush2.msra.mxu0 0.0
    %488 = vmatprep.subr.mxu0 0.0
    %489 = vmatpush2.msra.mxu0 0.0
    %490 = vmatprep.subr.mxu0 0.0
    %491 = vmatpush2.msra.mxu0 0.0
    %492 = vmatprep.subr.mxu0 0.0
    %493 = vmatpush2.msra.mxu0 0.0
    %494 = vmatprep.subr.mxu0 0.0
    %495 = vmatpush2.msra.mxu0 0.0
    %496 = vmatprep.subr.mxu0 0.0
    %497 = vmatpush2.msra.mxu0 0.0
    %498 = vmatprep.subr.mxu0 0.0
    %499 = vmatpush2.msra.mxu0 0.0
    %500 = vmatprep.subr.mxu0 0.0
    %501 = vmatpush2.msra.mxu0 0.0
    %502 = vmatprep.subr.mxu0 0.0
    %503 = vmatpush2.msra.mxu0 0.0
    %504 = vmatprep.subr.mxu0 0.0
    %505 = vmatpush2.msra.mxu0 0.0
    %506 = vmatprep.subr.mxu0 0.0
    %507 = vmatpush2.msra.mxu0 0.0
    %508 = vmatprep.mubr.f32.mxu0 0.0
    %509 = vmatmul.mubr.f32.gmra.mxu0 %v442
    %v510 = vpop.f32.mrf.mxu0
    %v511 = vadd.f32 %v439, %v510
    %v512 = vpop.f32.mrf.mxu0
    %513 = vdwg.mxu0
    %514 = vst [vmem:[#allocation2] sm:$0x3] %v511
    // Predicated region
    $region46: #{tpu_custom_call.1} parent=1 // pred_check
      _
    $region47: #{tpu_custom_call.1} parent=1 // pred_check_branch
      %516 = sbr.rel (0) target = $region49
    $region48: #{tpu_custom_call.1} parent=1 // pred_region
      %s518 = ssub.s32 32, 32
      %519 = vsyncadd [#allocation3], %s518
      %s521 = sshll.u32 [#allocation2], 4
      %s522 = int_to_ptr.vmem [resolvable:$true] %s521
      %524 = dma.vmem_to_hbm [thread:$0]  %s522, 32, %s11, [#allocation3]
    $region49: #{tpu_custom_call.1} parent=1 // pred_fallthru
      _
    // Predicated region
    $region50: #{tpu_custom_call.1} parent=1 // pred_check
      _
    $region51: #{tpu_custom_call.1} parent=1 // pred_check_branch
      %526 = sbr.rel (0) target = $region53
    $region52: #{tpu_custom_call.1} parent=1 // pred_region
      %527 = dma.done [#allocation3], 32
    $region53: #{tpu_custom_call.1} parent=1 // pred_fallthru
      _
    %528 = vsyncpa [#allocation3], 1

</llo_original>
